<compile_context>
chip_gen: v6e
topology: v6e:2x2x1
jax: 0.10.0
libtpu: 0.0.40
codegen_flags: <defaults>
</compile_context>

<pallas_src>
import jax
import jax.numpy as jnp
from jax import lax
from jax.experimental import pallas as pl
from jax.experimental.pallas import tpu as pltpu

# Architecture constants implied by ConvNet(hidden=64, output=10) on 28x28 MNIST:
KH = KW = 7
STRIDE = 3
C_OUT = 4
OH = OW = 8                   # (28 - 7)//3 + 1 = 8
PATCH = KH * KW               # 49
SPATIAL = OH * OW             # 64
FLAT = C_OUT * SPATIAL        # 256  (matches x.view(-1, 256))
HIDDEN = 64
OUTPUT = 10
LANE_PAD = 128                # pad the fc2 output to a full lane tile


def convnet_kernel(wcb_ref, p_ref, bc_ref, w1r_ref, b1_ref, w2p_ref, b2p_ref,
                   o_ref, conv_sc):
    """Whole forward pass for the batch in one program (no grid).

    wcb_ref  : (B, C_OUT, PATCH)     conv weight broadcast over batch (O(B), packed once)
    p_ref    : (B, PATCH, SPATIAL)   im2col patches (lane = oh*8 + ow)
    bc_ref   : (1, C_OUT, SPATIAL)   conv bias, pre-broadcast along spatial
    w1r_ref  : (C_OUT, SPATIAL, HIDDEN)  fc1 weight with the channel-major flatten
                                         folded in: w1r[k, s, j] = w1[j, k*64 + s]
    b1_ref   : (1, HIDDEN)
    w2p_ref  : (HIDDEN, 128)         fc2 weight transposed, zero-padded to 128 lanes
    b2p_ref  : (1, 128)              fc2 bias, zero-padded to 128 lanes
    o_ref    : (B, 128)              padded logits (first OUTPUT lanes are real)
    conv_sc  : (B, C_OUT, SPATIAL)   f32 scratch holding the squared conv activations
    """
    # --- conv1: one batched matmul over the batch dim (batch-independent weight) ---
    conv = lax.dot_general(
        wcb_ref[...], p_ref[...],
        dimension_numbers=(((2,), (1,)), ((0,), (0,))),   # contract PATCH, batch B
        preferred_element_type=jnp.float32)               # (B, C_OUT, SPATIAL)
    conv = conv + bc_ref[...]                              # bias (leading-dim broadcast)
    conv_sc[...] = conv * conv                             # square activation

    # --- fc1: channel-major flatten folded in; 4 independent dots, tree-summed ---
    parts = [
        jnp.dot(conv_sc[:, k, :], w1r_ref[k], preferred_element_type=jnp.float32)
        for k in range(C_OUT)                              # static, 4 iterations
    ]
    h = (parts[0] + parts[1]) + (parts[2] + parts[3]) + b1_ref[...]   # (B, HIDDEN)
    h = h * h                                              # square activation

    # --- fc2: single lane-dense (B, 128) unmasked store ---
    o_ref[...] = (jnp.dot(h, w2p_ref[...], preferred_element_type=jnp.float32)
                  + b2p_ref[...])


def pack_params(params, batch):
    """One-time packing of every parameter-derived operand (hoisted off the hot path)."""
    wc, bc, w1, b1, w2, b2 = params

    # Conv weight: (C_OUT, 1, KH, KW) -> (C_OUT, PATCH), broadcast over batch (O(B)).
    wc_mat = wc.reshape(C_OUT, PATCH)
    wcb = jnp.broadcast_to(wc_mat[None], (batch, C_OUT, PATCH)) + 0.0  # materialize

    # Conv bias pre-broadcast along spatial so the in-kernel add is a pure
    # leading-dim broadcast.
    bc_sp = jnp.broadcast_to(bc.reshape(1, C_OUT, 1), (1, C_OUT, SPATIAL)) + 0.0

    # Fold PyTorch's channel-major x.view(-1, 256) into fc1: w1r[k, s, j] = w1[j, k*64+s]
    w1r = jnp.transpose(w1.reshape(HIDDEN, C_OUT, SPATIAL), (1, 2, 0))   # (4, 64, 64)
    b1_row = b1.reshape(1, HIDDEN)

    # fc2 padded to a full 128-lane tile for a single unmasked store.
    w2p = jnp.zeros((HIDDEN, LANE_PAD), w2.dtype).at[:, :OUTPUT].set(w2.T)
    b2p = jnp.zeros((1, LANE_PAD), b2.dtype).at[:, :OUTPUT].set(b2.reshape(1, OUTPUT))

    return wcb, bc_sp, w1r, b1_row, w2p, b2p


def convnet_forward(x, packed):
    """Per-call path: im2col + one Pallas kernel + logits slice.

    x: (B, 1, 28, 28) float32 NCHW.  `packed` comes from pack_params().
    """
    wcb, bc_sp, w1r, b1_row, w2p, b2p = packed
    B = x.shape[0]

    # One-op im2col: (B, 1, 28, 28) -> (B, PATCH, OH, OW) -> (B, PATCH, SPATIAL).
    # (patch feature ordering is (C_IN, KH, KW); with C_IN=1 it matches wc_mat.)
    patches = lax.conv_general_dilated_patches(
        x, filter_shape=(KH, KW), window_strides=(STRIDE, STRIDE),
        padding="VALID", dimension_numbers=("NCHW", "OIHW", "NCHW"))
    patches = patches.reshape(B, PATCH, SPATIAL)

    out_pad = pl.pallas_call(
        convnet_kernel,
        out_shape=jax.ShapeDtypeStruct((B, LANE_PAD), jnp.float32),
        scratch_shapes=[pltpu.VMEM((B, C_OUT, SPATIAL), jnp.float32)],
    )(wcb, patches, bc_sp, w1r, b1_row, w2p, b2p)

    return out_pad[:, :OUTPUT]


def reference_forward(x, params):
    """Pure-JAX reference matching the PyTorch forward exactly."""
    wc, bc, w1, b1, w2, b2 = params
    conv = lax.conv_general_dilated(
        x, wc, window_strides=(STRIDE, STRIDE), padding="VALID",
        dimension_numbers=("NCHW", "OIHW", "NCHW"))
    conv = conv + bc.reshape(1, C_OUT, 1, 1)
    conv = conv * conv
    flat = conv.reshape(x.shape[0], FLAT)
    h = flat @ w1.T + b1
    h = h * h
    return h @ w2.T + b2


def init_params(key):
    k = jax.random.split(key, 6)
    wc = jax.random.normal(k[0], (C_OUT, 1, KH, KW), jnp.float32) * 0.1
    bc = jax.random.normal(k[1], (C_OUT,), jnp.float32) * 0.1
    w1 = jax.random.normal(k[2], (HIDDEN, FLAT), jnp.float32) * 0.05
    b1 = jax.random.normal(k[3], (HIDDEN,), jnp.float32) * 0.05
    w2 = jax.random.normal(k[4], (OUTPUT, HIDDEN), jnp.float32) * 0.05
    b2 = jax.random.normal(k[5], (OUTPUT,), jnp.float32) * 0.05
    return wc, bc, w1, b1, w2, b2


if __name__ == "__main__":
    key = jax.random.PRNGKey(0)
    kx, kp = jax.random.split(key)
    x = jax.random.normal(kx, (2, 1, 28, 28), jnp.float32)   # batch=2, NCHW MNIST
    params = init_params(kp)

    packed = pack_params(params, batch=x.shape[0])           # one-time param packing
    fwd = jax.jit(convnet_forward)                           # hot path: im2col + kernel

    out = jax.block_until_ready(fwd(x, packed))
    ref = jax.block_until_ready(reference_forward(x, params))

    assert out.shape == (2, OUTPUT)
    assert jnp.allclose(out, ref, rtol=1e-4, atol=1e-4), "mismatch vs reference"
    print("KERNEL_OK")
</pallas_src>

<mosaic_0001>
module attributes {stable_mosaic.version = 11 : i64} {
  func.func @convnet_kernel(%arg0: memref<2x4x49xf32, #tpu.memory_space<vmem>>, %arg1: memref<2x49x64xf32, #tpu.memory_space<vmem>>, %arg2: memref<1x4x64xf32, #tpu.memory_space<vmem>>, %arg3: memref<4x64x64xf32, #tpu.memory_space<vmem>>, %arg4: memref<1x64xf32, #tpu.memory_space<vmem>>, %arg5: memref<64x128xf32, #tpu.memory_space<vmem>>, %arg6: memref<1x128xf32, #tpu.memory_space<vmem>>, %arg7: memref<2x128xf32, #tpu.memory_space<vmem>>, %arg8: memref<2x4x64xf32, #tpu.memory_space<vmem>>) attributes {dimension_semantics = [], scalar_prefetch = 0 : i64, scratch_operands = 1 : i64, tpu.core_type = #tpu.core_type<tc>} {
    %c0 = arith.constant 0 : index
    %c0_0 = arith.constant 0 : index
    %c0_1 = arith.constant 0 : index
    %0 = vector.load %arg0[%c0, %c0_0, %c0_1] : memref<2x4x49xf32, #tpu.memory_space<vmem>>, vector<2x4x49xf32>
    %c0_2 = arith.constant 0 : index
    %c0_3 = arith.constant 0 : index
    %c0_4 = arith.constant 0 : index
    %1 = vector.load %arg1[%c0_2, %c0_3, %c0_4] : memref<2x49x64xf32, #tpu.memory_space<vmem>>, vector<2x49x64xf32>
    %cst = arith.constant dense<0.000000e+00> : vector<2x4x64xf32>
    %2 = tpu.matmul %0, %1, %cst {dimension_numbers = #tpu.dot_dimension_numbers<[2], [1], [1], [2], [0, 0, 0, 1, 1, 2], [0], [0]>} : vector<2x4x49xf32>, vector<2x49x64xf32>, vector<2x4x64xf32> -> vector<2x4x64xf32>
    %c0_5 = arith.constant 0 : index
    %c0_6 = arith.constant 0 : index
    %c0_7 = arith.constant 0 : index
    %3 = vector.load %arg2[%c0_5, %c0_6, %c0_7] : memref<1x4x64xf32, #tpu.memory_space<vmem>>, vector<1x4x64xf32>
    %4 = vector.broadcast %3 : vector<1x4x64xf32> to vector<2x4x64xf32>
    %5 = arith.addf %2, %4 : vector<2x4x64xf32>
    %6 = arith.mulf %5, %5 : vector<2x4x64xf32>
    %c0_8 = arith.constant 0 : index
    %c0_9 = arith.constant 0 : index
    %c0_10 = arith.constant 0 : index
    %7 = vector.load %arg8[%c0_8, %c0_9, %c0_10] : memref<2x4x64xf32, #tpu.memory_space<vmem>>, vector<2x4x64xf32>
    tpu.vector_store %arg8[%c0_8, %c0_9, %c0_10], %6 {strides = array<i32>} : memref<2x4x64xf32, #tpu.memory_space<vmem>>, vector<2x4x64xf32>,
    %c0_11 = arith.constant 0 : index
    %c0_12 = arith.constant 0 : index
    %c0_13 = arith.constant 0 : index
    %8 = vector.load %arg8[%c0_11, %c0_12, %c0_13] : memref<2x4x64xf32, #tpu.memory_space<vmem>>, vector<2x1x64xf32>
    %9 = vector.shape_cast %8 : vector<2x1x64xf32> to vector<2x64xf32>
    %c0_14 = arith.constant 0 : index
    %c0_15 = arith.constant 0 : index
    %c0_16 = arith.constant 0 : index
    %10 = vector.load %arg3[%c0_14, %c0_15, %c0_16] : memref<4x64x64xf32, #tpu.memory_space<vmem>>, vector<1x64x64xf32>
    %11 = vector.shape_cast %10 : vector<1x64x64xf32> to vector<64x64xf32>
    %cst_17 = arith.constant dense<0.000000e+00> : vector<2x64xf32>
    %12 = tpu.matmul %9, %11, %cst_17 {dimension_numbers = #tpu.dot_dimension_numbers<[1], [0], [0], [1], [0, 0, 1, 1], [], []>} : vector<2x64xf32>, vector<64x64xf32>, vector<2x64xf32> -> vector<2x64xf32>
    %c0_18 = arith.constant 0 : index
    %c1 = arith.constant 1 : index
    %c0_19 = arith.constant 0 : index
    %13 = vector.load %arg8[%c0_18, %c1, %c0_19] : memref<2x4x64xf32, #tpu.memory_space<vmem>>, vector<2x1x64xf32>
    %14 = vector.shape_cast %13 : vector<2x1x64xf32> to vector<2x64xf32>
    %c1_20 = arith.constant 1 : index
    %c0_21 = arith.constant 0 : index
    %c0_22 = arith.constant 0 : index
    %15 = vector.load %arg3[%c1_20, %c0_21, %c0_22] : memref<4x64x64xf32, #tpu.memory_space<vmem>>, vector<1x64x64xf32>
    %16 = vector.shape_cast %15 : vector<1x64x64xf32> to vector<64x64xf32>
    %cst_23 = arith.constant dense<0.000000e+00> : vector<2x64xf32>
    %17 = tpu.matmul %14, %16, %cst_23 {dimension_numbers = #tpu.dot_dimension_numbers<[1], [0], [0], [1], [0, 0, 1, 1], [], []>} : vector<2x64xf32>, vector<64x64xf32>, vector<2x64xf32> -> vector<2x64xf32>
    %c0_24 = arith.constant 0 : index
    %c2 = arith.constant 2 : index
    %c0_25 = arith.constant 0 : index
    %18 = vector.load %arg8[%c0_24, %c2, %c0_25] : memref<2x4x64xf32, #tpu.memory_space<vmem>>, vector<2x1x64xf32>
    %19 = vector.shape_cast %18 : vector<2x1x64xf32> to vector<2x64xf32>
    %c2_26 = arith.constant 2 : index
    %c0_27 = arith.constant 0 : index
    %c0_28 = arith.constant 0 : index
    %20 = vector.load %arg3[%c2_26, %c0_27, %c0_28] : memref<4x64x64xf32, #tpu.memory_space<vmem>>, vector<1x64x64xf32>
    %21 = vector.shape_cast %20 : vector<1x64x64xf32> to vector<64x64xf32>
    %cst_29 = arith.constant dense<0.000000e+00> : vector<2x64xf32>
    %22 = tpu.matmul %19, %21, %cst_29 {dimension_numbers = #tpu.dot_dimension_numbers<[1], [0], [0], [1], [0, 0, 1, 1], [], []>} : vector<2x64xf32>, vector<64x64xf32>, vector<2x64xf32> -> vector<2x64xf32>
    %c0_30 = arith.constant 0 : index
    %c3 = arith.constant 3 : index
    %c0_31 = arith.constant 0 : index
    %23 = vector.load %arg8[%c0_30, %c3, %c0_31] : memref<2x4x64xf32, #tpu.memory_space<vmem>>, vector<2x1x64xf32>
    %24 = vector.shape_cast %23 : vector<2x1x64xf32> to vector<2x64xf32>
    %c3_32 = arith.constant 3 : index
    %c0_33 = arith.constant 0 : index
    %c0_34 = arith.constant 0 : index
    %25 = vector.load %arg3[%c3_32, %c0_33, %c0_34] : memref<4x64x64xf32, #tpu.memory_space<vmem>>, vector<1x64x64xf32>
    %26 = vector.shape_cast %25 : vector<1x64x64xf32> to vector<64x64xf32>
    %cst_35 = arith.constant dense<0.000000e+00> : vector<2x64xf32>
    %27 = tpu.matmul %24, %26, %cst_35 {dimension_numbers = #tpu.dot_dimension_numbers<[1], [0], [0], [1], [0, 0, 1, 1], [], []>} : vector<2x64xf32>, vector<64x64xf32>, vector<2x64xf32> -> vector<2x64xf32>
    %28 = arith.addf %12, %17 : vector<2x64xf32>
    %29 = arith.addf %22, %27 : vector<2x64xf32>
    %30 = arith.addf %28, %29 : vector<2x64xf32>
    %c0_36 = arith.constant 0 : index
    %c0_37 = arith.constant 0 : index
    %31 = vector.load %arg4[%c0_36, %c0_37] : memref<1x64xf32, #tpu.memory_space<vmem>>, vector<1x64xf32>
    %32 = vector.broadcast %31 : vector<1x64xf32> to vector<2x64xf32>
    %33 = arith.addf %30, %32 : vector<2x64xf32>
    %34 = arith.mulf %33, %33 : vector<2x64xf32>
    %c0_38 = arith.constant 0 : index
    %c0_39 = arith.constant 0 : index
    %35 = vector.load %arg5[%c0_38, %c0_39] : memref<64x128xf32, #tpu.memory_space<vmem>>, vector<64x128xf32>
    %cst_40 = arith.constant dense<0.000000e+00> : vector<2x128xf32>
    %36 = tpu.matmul %34, %35, %cst_40 {dimension_numbers = #tpu.dot_dimension_numbers<[1], [0], [0], [1], [0, 0, 1, 1], [], []>} : vector<2x64xf32>, vector<64x128xf32>, vector<2x128xf32> -> vector<2x128xf32>
    %c0_41 = arith.constant 0 : index
    %c0_42 = arith.constant 0 : index
    %37 = vector.load %arg6[%c0_41, %c0_42] : memref<1x128xf32, #tpu.memory_space<vmem>>, vector<1x128xf32>
    %38 = vector.broadcast %37 : vector<1x128xf32> to vector<2x128xf32>
    %39 = arith.addf %36, %38 : vector<2x128xf32>
    %c0_43 = arith.constant 0 : index
    %c0_44 = arith.constant 0 : index
    %40 = vector.load %arg7[%c0_43, %c0_44] : memref<2x128xf32, #tpu.memory_space<vmem>>, vector<2x128xf32>
    tpu.vector_store %arg7[%c0_43, %c0_44], %39 {strides = array<i32>} : memref<2x128xf32, #tpu.memory_space<vmem>>, vector<2x128xf32>,
    return
  }
}

</mosaic_0001>

<llo_original>
// kernel: convnet_forward.1
$region0: #{convnet_forward.1}
  #allocation0 [shape = 'u32[]', space=smem, size = 0x4, offset = 0x4, fixed_abs, tag = 'smem constant byte address 0x4 - core index']
  #allocation1 [shape = 'u32[144,128]{1,0:T(1,128)}', space=vmem, size = 0x12000, scoped, tag = 'internal scratch']
  #allocation2 [shape = 'f32[2,4,64]{2,1,0:T(4,128)}', space=vmem, size = 0x1000, scoped, tag = 'scratch operand']
  %s0 = inlined_call_operand.vmem [shape: f32[2,4,49], index: 0, kind: input, shape index: {}]
  %s1 = inlined_call_operand.vmem [shape: f32[2,49,64], index: 1, kind: input, shape index: {}]
  %s2 = inlined_call_operand.vmem [shape: f32[1,4,64], index: 2, kind: input, shape index: {}]
  %s3 = inlined_call_operand.vmem [shape: f32[4,64,64], index: 3, kind: input, shape index: {}]
  %s4 = inlined_call_operand.vmem [shape: f32[1,64], index: 4, kind: input, shape index: {}]
  %s5 = inlined_call_operand.vmem [shape: f32[64,128], index: 5, kind: input, shape index: {}]
  %s6 = inlined_call_operand.vmem [shape: f32[1,128], index: 6, kind: input, shape index: {}]
  %s7 = inlined_call_operand.hbm [shape: f32[2,128], index: 7, kind: output, shape index: {}]
  %s8 = sld [smem:[#allocation0]]
  $region38: #{convnet_forward.1} parent=0
    _
  %s10 = ssub.s32 1, %s8
  %s11 = scalar_select 0, %s10, %s8
  $region1: #{convnet_forward.1} parent=0
    #allocation3 [shape = 'u8[1024]{0}', space=vmem, size = 0x400, scoped, tag = 'output window, operand 0, single buffered']
    #allocation4 [shape = 's32[1]{0}', space=sflag, size = 0x4, scoped, tag = 'scoped memory for convnet_forward.1']
    %12 = vsyncpa [#allocation4], 0
    // Predicated region
    $region2: #{convnet_forward.1} parent=1 // pred_check
      _
    $region3: #{convnet_forward.1} parent=1 // pred_check_branch
      %14 = sbr.rel (0) target = $region5
    $region4: #{convnet_forward.1} parent=1 // pred_region
      _
    $region5: #{convnet_forward.1} parent=1 // pred_fallthru
      _
    // Predicated region
    $region6: #{convnet_forward.1} parent=1 // pred_check
      _
    $region7: #{convnet_forward.1} parent=1 // pred_check_branch
      %16 = sbr.rel (0) target = $region9
    $region8: #{convnet_forward.1} parent=1 // pred_region
      _
    $region9: #{convnet_forward.1} parent=1 // pred_fallthru
      _
    // Predicated region
    $region10: #{convnet_forward.1} parent=1 // pred_check
      _
    $region11: #{convnet_forward.1} parent=1 // pred_check_branch
      %18 = sbr.rel (0) target = $region13
    $region12: #{convnet_forward.1} parent=1 // pred_region
      _
    $region13: #{convnet_forward.1} parent=1 // pred_fallthru
      _
    // Predicated region
    $region14: #{convnet_forward.1} parent=1 // pred_check
      _
    $region15: #{convnet_forward.1} parent=1 // pred_check_branch
      %20 = sbr.rel (0) target = $region17
    $region16: #{convnet_forward.1} parent=1 // pred_region
      _
    $region17: #{convnet_forward.1} parent=1 // pred_fallthru
      _
    // Predicated region
    $region18: #{convnet_forward.1} parent=1 // pred_check
      _
    $region19: #{convnet_forward.1} parent=1 // pred_check_branch
      %22 = sbr.rel (0) target = $region21
    $region20: #{convnet_forward.1} parent=1 // pred_region
      _
    $region21: #{convnet_forward.1} parent=1 // pred_fallthru
      _
    // Predicated region
    $region22: #{convnet_forward.1} parent=1 // pred_check
      _
    $region23: #{convnet_forward.1} parent=1 // pred_check_branch
      %24 = sbr.rel (0) target = $region25
    $region24: #{convnet_forward.1} parent=1 // pred_region
      _
    $region25: #{convnet_forward.1} parent=1 // pred_fallthru
      _
    // Predicated region
    $region26: #{convnet_forward.1} parent=1 // pred_check
      _
    $region27: #{convnet_forward.1} parent=1 // pred_check_branch
      %26 = sbr.rel (0) target = $region29
    $region28: #{convnet_forward.1} parent=1 // pred_region
      _
    $region29: #{convnet_forward.1} parent=1 // pred_fallthru
      _
    %v27 = vld [vmem:[%s0] sm:$0xf]
    %v28 = vld [vmem:[%s0 + $0x4] sm:$0xf]
    %v29 = vld [vmem:[%s1] sm:$0xff]
    %v30 = vld [vmem:[%s1 + $0x8] sm:$0xff]
    %v31 = vld [vmem:[%s1 + $0x10] sm:$0xff]
    %v32 = vld [vmem:[%s1 + $0x18] sm:$0xff]
    %v33 = vld [vmem:[%s1 + $0x20] sm:$0xff]
    %v34 = vld [vmem:[%s1 + $0x28] sm:$0xff]
    %v35 = vld [vmem:[%s1 + $0x30] sm:$0x1]
    %v36 = vld [vmem:[%s1 + $0x38] sm:$0xff]
    %v37 = vld [vmem:[%s1 + $0x40] sm:$0xff]
    %v38 = vld [vmem:[%s1 + $0x48] sm:$0xff]
    %v39 = vld [vmem:[%s1 + $0x50] sm:$0xff]
    %v40 = vld [vmem:[%s1 + $0x58] sm:$0xff]
    %v41 = vld [vmem:[%s1 + $0x60] sm:$0xff]
    %v42 = vld [vmem:[%s1 + $0x68] sm:$0x1]
    %v43 = vld [vmem:[%s2] sm:$0xf]
    %vm44 = vcmask 400384
    %v46 = vsel %vm44, %v27, 0
    %vm48 = vcmask 1040384
    %v50 = vsel %vm48, %v35, 0
    %52 = vmatprep.subr.mxu0 0.0
    %53 = vmatpush1.msra.mxu0 0.0
    %54 = vmatprep.subr.mxu0 0.0
    %55 = vmatpush1.msra.mxu0 0.0
    %56 = vmatprep.subr.mxu0 0.0
    %57 = vmatpush1.msra.mxu0 0.0
    %58 = vmatprep.subr.mxu0 0.0
    %59 = vmatpush1.msra.mxu0 0.0
    %60 = vmatprep.subr.mxu0 0.0
    %61 = vmatpush1.msra.mxu0 0.0
    %62 = vmatprep.subr.mxu0 0.0
    %63 = vmatpush1.msra.mxu0 0.0
    %64 = vmatprep.subr.mxu0 0.0
    %65 = vmatpush1.msra.mxu0 0.0
    %66 = vmatprep.subr.mxu0 0.0
    %67 = vmatpush1.msra.mxu0 0.0
    %68 = vmatprep.subr.mxu0 0.0
    %69 = vmatpush1.msra.mxu0 0.0
    %70 = vmatprep.subr.mxu0 0.0
    %71 = vmatpush1.msra.mxu0 %v50
    %72 = vmatprep.subr.mxu0 0.0
    %73 = vmatpush1.msra.mxu0 %v34
    %74 = vmatprep.subr.mxu0 0.0
    %75 = vmatpush1.msra.mxu0 %v33
    %76 = vmatprep.subr.mxu0 0.0
    %77 = vmatpush1.msra.mxu0 %v32
    %78 = vmatprep.subr.mxu0 0.0
    %79 = vmatpush1.msra.mxu0 %v31
    %80 = vmatprep.subr.mxu0 0.0
    %81 = vmatpush1.msra.mxu0 %v30
    %82 = vmatprep.subr.mxu0 0.0
    %83 = vmatpush1.msra.mxu0 %v29
    %84 = vmatprep.subr.mxu0 0.0
    %85 = vmatpush2.msra.mxu0 0.0
    %86 = vmatprep.subr.mxu0 0.0
    %87 = vmatpush2.msra.mxu0 0.0
    %88 = vmatprep.subr.mxu0 0.0
    %89 = vmatpush2.msra.mxu0 0.0
    %90 = vmatprep.subr.mxu0 0.0
    %91 = vmatpush2.msra.mxu0 0.0
    %92 = vmatprep.subr.mxu0 0.0
    %93 = vmatpush2.msra.mxu0 0.0
    %94 = vmatprep.subr.mxu0 0.0
    %95 = vmatpush2.msra.mxu0 0.0
    %96 = vmatprep.subr.mxu0 0.0
    %97 = vmatpush2.msra.mxu0 0.0
    %98 = vmatprep.subr.mxu0 0.0
    %99 = vmatpush2.msra.mxu0 0.0
    %100 = vmatprep.subr.mxu0 0.0
    %101 = vmatpush2.msra.mxu0 0.0
    %102 = vmatprep.subr.mxu0 0.0
    %103 = vmatpush2.msra.mxu0 0.0
    %104 = vmatprep.subr.mxu0 0.0
    %105 = vmatpush2.msra.mxu0 0.0
    %106 = vmatprep.subr.mxu0 0.0
    %107 = vmatpush2.msra.mxu0 0.0
    %108 = vmatprep.subr.mxu0 0.0
    %109 = vmatpush2.msra.mxu0 0.0
    %110 = vmatprep.subr.mxu0 0.0
    %111 = vmatpush2.msra.mxu0 0.0
    %112 = vmatprep.subr.mxu0 0.0
    %113 = vmatpush2.msra.mxu0 0.0
    %114 = vmatprep.subr.mxu0 0.0
    %115 = vmatpush2.msra.mxu0 0.0
    %116 = vmatprep.mubr.f32.mxu0 0.0
    %117 = vmatmul.mubr.f32.gmra.mxu0 %v46
    %v118 = vpop.f32.mrf.mxu0
    %v119 = vadd.f32 %v43, %v118
    %v120 = vpop.f32.mrf.mxu0
    %121 = vdwg.mxu0
    %v123 = vsel %vm44, %v28, 0
    %v126 = vsel %vm48, %v42, 0
    %128 = vmatprep.subr.mxu0 0.0
    %129 = vmatpush1.msra.mxu0 0.0
    %130 = vmatprep.subr.mxu0 0.0
    %131 = vmatpush1.msra.mxu0 0.0
    %132 = vmatprep.subr.mxu0 0.0
    %133 = vmatpush1.msra.mxu0 0.0
    %134 = vmatprep.subr.mxu0 0.0
    %135 = vmatpush1.msra.mxu0 0.0
    %136 = vmatprep.subr.mxu0 0.0
    %137 = vmatpush1.msra.mxu0 0.0
    %138 = vmatprep.subr.mxu0 0.0
    %139 = vmatpush1.msra.mxu0 0.0
    %140 = vmatprep.subr.mxu0 0.0
    %141 = vmatpush1.msra.mxu0 0.0
    %142 = vmatprep.subr.mxu0 0.0
    %143 = vmatpush1.msra.mxu0 0.0
    %144 = vmatprep.subr.mxu0 0.0
    %145 = vmatpush1.msra.mxu0 0.0
    %146 = vmatprep.subr.mxu0 0.0
    %147 = vmatpush1.msra.mxu0 %v126
    %148 = vmatprep.subr.mxu0 0.0
    %149 = vmatpush1.msra.mxu0 %v41
    %150 = vmatprep.subr.mxu0 0.0
    %151 = vmatpush1.msra.mxu0 %v40
    %152 = vmatprep.subr.mxu0 0.0
    %153 = vmatpush1.msra.mxu0 %v39
    %154 = vmatprep.subr.mxu0 0.0
    %155 = vmatpush1.msra.mxu0 %v38
    %156 = vmatprep.subr.mxu0 0.0
    %157 = vmatpush1.msra.mxu0 %v37
    %158 = vmatprep.subr.mxu0 0.0
    %159 = vmatpush1.msra.mxu0 %v36
    %160 = vmatprep.subr.mxu0 0.0
    %161 = vmatpush2.msra.mxu0 0.0
    %162 = vmatprep.subr.mxu0 0.0
    %163 = vmatpush2.msra.mxu0 0.0
    %164 = vmatprep.subr.mxu0 0.0
    %165 = vmatpush2.msra.mxu0 0.0
    %166 = vmatprep.subr.mxu0 0.0
    %167 = vmatpush2.msra.mxu0 0.0
    %168 = vmatprep.subr.mxu0 0.0
    %169 = vmatpush2.msra.mxu0 0.0
    %170 = vmatprep.subr.mxu0 0.0
    %171 = vmatpush2.msra.mxu0 0.0
    %172 = vmatprep.subr.mxu0 0.0
    %173 = vmatpush2.msra.mxu0 0.0
    %174 = vmatprep.subr.mxu0 0.0
    %175 = vmatpush2.msra.mxu0 0.0
    %176 = vmatprep.subr.mxu0 0.0
    %177 = vmatpush2.msra.mxu0 0.0
    %178 = vmatprep.subr.mxu0 0.0
    %179 = vmatpush2.msra.mxu0 0.0
    %180 = vmatprep.subr.mxu0 0.0
    %181 = vmatpush2.msra.mxu0 0.0
    %182 = vmatprep.subr.mxu0 0.0
    %183 = vmatpush2.msra.mxu0 0.0
    %184 = vmatprep.subr.mxu0 0.0
    %185 = vmatpush2.msra.mxu0 0.0
    %186 = vmatprep.subr.mxu0 0.0
    %187 = vmatpush2.msra.mxu0 0.0
    %188 = vmatprep.subr.mxu0 0.0
    %189 = vmatpush2.msra.mxu0 0.0
    %190 = vmatprep.subr.mxu0 0.0
    %191 = vmatpush2.msra.mxu0 0.0
    %192 = vmatprep.mubr.f32.mxu0 0.0
    %193 = vmatmul.mubr.f32.gmra.mxu0 %v123
    %v194 = vpop.f32.mrf.mxu0
    %v195 = vadd.f32 %v43, %v194
    %v196 = vpop.f32.mrf.mxu0
    %197 = vdwg.mxu0
    %v198 = vmul.f32 %v119, %v119
    %v199 = vmul.f32 %v195, %v195
    %vm200 = vcmask 519168
    %201 = vst.msk [vmem:[#allocation2] sm:$0xf] %vm200, %v198
    %202 = vst.msk [vmem:[#allocation2 + $0x4] sm:$0xf] %vm200, %v199
    %v203 = vld [vmem:[#allocation2] sm:$0x1]
    %v204 = vld [vmem:[#allocation2 + $0x4] sm:$0x1]
    %v205 = vld [vmem:[%s3] sm:$0xff]
    %v206 = vld [vmem:[%s3 + $0x8] sm:$0xff]
    %v207 = vld [vmem:[%s3 + $0x10] sm:$0xff]
    %v208 = vld [vmem:[%s3 + $0x18] sm:$0xff]
    %v209 = vld [vmem:[%s3 + $0x20] sm:$0xff]
    %v210 = vld [vmem:[%s3 + $0x28] sm:$0xff]
    %v211 = vld [vmem:[%s3 + $0x30] sm:$0xff]
    %v212 = vld [vmem:[%s3 + $0x38] sm:$0xff]
    %v213 = vld [vmem:[#allocation2 + $0x1] sm:$0x1]
    %v214 = vld [vmem:[#allocation2 + $0x5] sm:$0x1]
    %s215 = scalar_lea.vmem %s3, 64
    %v216 = vld [vmem:[%s215] sm:$0xff]
    %v217 = vld [vmem:[%s215 + $0x8] sm:$0xff]
    %v218 = vld [vmem:[%s215 + $0x10] sm:$0xff]
    %v219 = vld [vmem:[%s215 + $0x18] sm:$0xff]
    %v220 = vld [vmem:[%s215 + $0x20] sm:$0xff]
    %v221 = vld [vmem:[%s215 + $0x28] sm:$0xff]
    %v222 = vld [vmem:[%s215 + $0x30] sm:$0xff]
    %v223 = vld [vmem:[%s215 + $0x38] sm:$0xff]
    %v226 = vrot.slane %v214, 7
    %vm227 = vcmask 1041409
    %v228 = vsel %vm227, %v226, %v213
    %vm229 = vcmask 523264
    %v230 = vsel %vm229, %v228, 0
    %232 = vmatprep.subr.mxu0 0.0
    %233 = vmatpush1.msra.mxu0 0.0
    %234 = vmatprep.subr.mxu0 0.0
    %235 = vmatpush1.msra.mxu0 0.0
    %236 = vmatprep.subr.mxu0 0.0
    %237 = vmatpush1.msra.mxu0 0.0
    %238 = vmatprep.subr.mxu0 0.0
    %239 = vmatpush1.msra.mxu0 0.0
    %240 = vmatprep.subr.mxu0 0.0
    %241 = vmatpush1.msra.mxu0 0.0
    %242 = vmatprep.subr.mxu0 0.0
    %243 = vmatpush1.msra.mxu0 0.0
    %244 = vmatprep.subr.mxu0 0.0
    %245 = vmatpush1.msra.mxu0 0.0
    %246 = vmatprep.subr.mxu0 0.0
    %247 = vmatpush1.msra.mxu0 0.0
    %248 = vmatprep.subr.mxu0 0.0
    %249 = vmatpush1.msra.mxu0 %v223
    %250 = vmatprep.subr.mxu0 0.0
    %251 = vmatpush1.msra.mxu0 %v222
    %252 = vmatprep.subr.mxu0 0.0
    %253 = vmatpush1.msra.mxu0 %v221
    %254 = vmatprep.subr.mxu0 0.0
    %255 = vmatpush1.msra.mxu0 %v220
    %256 = vmatprep.subr.mxu0 0.0
    %257 = vmatpush1.msra.mxu0 %v219
    %258 = vmatprep.subr.mxu0 0.0
    %259 = vmatpush1.msra.mxu0 %v218
    %260 = vmatprep.subr.mxu0 0.0
    %261 = vmatpush1.msra.mxu0 %v217
    %262 = vmatprep.subr.mxu0 0.0
    %263 = vmatpush1.msra.mxu0 %v216
    %264 = vmatprep.subr.mxu0 0.0
    %265 = vmatpush2.msra.mxu0 0.0
    %266 = vmatprep.subr.mxu0 0.0
    %267 = vmatpush2.msra.mxu0 0.0
    %268 = vmatprep.subr.mxu0 0.0
    %269 = vmatpush2.msra.mxu0 0.0
    %270 = vmatprep.subr.mxu0 0.0
    %271 = vmatpush2.msra.mxu0 0.0
    %272 = vmatprep.subr.mxu0 0.0
    %273 = vmatpush2.msra.mxu0 0.0
    %274 = vmatprep.subr.mxu0 0.0
    %275 = vmatpush2.msra.mxu0 0.0
    %276 = vmatprep.subr.mxu0 0.0
    %277 = vmatpush2.msra.mxu0 0.0
    %278 = vmatprep.subr.mxu0 0.0
    %279 = vmatpush2.msra.mxu0 0.0
    %280 = vmatprep.subr.mxu0 0.0
    %281 = vmatpush2.msra.mxu0 0.0
    %282 = vmatprep.subr.mxu0 0.0
    %283 = vmatpush2.msra.mxu0 0.0
    %284 = vmatprep.subr.mxu0 0.0
    %285 = vmatpush2.msra.mxu0 0.0
    %286 = vmatprep.subr.mxu0 0.0
    %287 = vmatpush2.msra.mxu0 0.0
    %288 = vmatprep.subr.mxu0 0.0
    %289 = vmatpush2.msra.mxu0 0.0
    %290 = vmatprep.subr.mxu0 0.0
    %291 = vmatpush2.msra.mxu0 0.0
    %292 = vmatprep.subr.mxu0 0.0
    %293 = vmatpush2.msra.mxu0 0.0
    %294 = vmatprep.subr.mxu0 0.0
    %295 = vmatpush2.msra.mxu0 0.0
    %296 = vmatprep.mubr.f32.mxu0 0.0
    %297 = vmatmul.mubr.f32.gmra.mxu0 %v230
    %v298 = vpop.f32.mrf.mxu0
    %v299 = vadd.f32 0.0, %v298
    %v300 = vpop.f32.mrf.mxu0
    %301 = vdwg.mxu0
    %v302 = vld [vmem:[#allocation2 + $0x2] sm:$0x1]
    %v303 = vld [vmem:[#allocation2 + $0x6] sm:$0x1]
    %s304 = scalar_lea.vmem %s3, 128
    %v305 = vld [vmem:[%s304] sm:$0xff]
    %v306 = vld [vmem:[%s304 + $0x8] sm:$0xff]
    %v307 = vld [vmem:[%s304 + $0x10] sm:$0xff]
    %v308 = vld [vmem:[%s304 + $0x18] sm:$0xff]
    %v309 = vld [vmem:[%s304 + $0x20] sm:$0xff]
    %v310 = vld [vmem:[%s304 + $0x28] sm:$0xff]
    %v311 = vld [vmem:[%s304 + $0x30] sm:$0xff]
    %v312 = vld [vmem:[%s304 + $0x38] sm:$0xff]
    %v313 = vld [vmem:[#allocation2 + $0x3] sm:$0x1]
    %v314 = vld [vmem:[#allocation2 + $0x7] sm:$0x1]
    %s315 = scalar_lea.vmem %s3, 192
    %v316 = vld [vmem:[%s315] sm:$0xff]
    %v317 = vld [vmem:[%s315 + $0x8] sm:$0xff]
    %v318 = vld [vmem:[%s315 + $0x10] sm:$0xff]
    %v319 = vld [vmem:[%s315 + $0x18] sm:$0xff]
    %v320 = vld [vmem:[%s315 + $0x20] sm:$0xff]
    %v321 = vld [vmem:[%s315 + $0x28] sm:$0xff]
    %v322 = vld [vmem:[%s315 + $0x30] sm:$0xff]
    %v323 = vld [vmem:[%s315 + $0x38] sm:$0xff]
    %v326 = vrot.slane %v314, 7
    %v327 = vsel %vm227, %v326, %v313
    %v328 = vsel %vm229, %v327, 0
    %330 = vmatprep.subr.mxu0 0.0
    %331 = vmatpush1.msra.mxu0 0.0
    %332 = vmatprep.subr.mxu0 0.0
    %333 = vmatpush1.msra.mxu0 0.0
    %334 = vmatprep.subr.mxu0 0.0
    %335 = vmatpush1.msra.mxu0 0.0
    %336 = vmatprep.subr.mxu0 0.0
    %337 = vmatpush1.msra.mxu0 0.0
    %338 = vmatprep.subr.mxu0 0.0
    %339 = vmatpush1.msra.mxu0 0.0
    %340 = vmatprep.subr.mxu0 0.0
    %341 = vmatpush1.msra.mxu0 0.0
    %342 = vmatprep.subr.mxu0 0.0
    %343 = vmatpush1.msra.mxu0 0.0
    %344 = vmatprep.subr.mxu0 0.0
    %345 = vmatpush1.msra.mxu0 0.0
    %346 = vmatprep.subr.mxu0 0.0
    %347 = vmatpush1.msra.mxu0 %v323
    %348 = vmatprep.subr.mxu0 0.0
    %349 = vmatpush1.msra.mxu0 %v322
    %350 = vmatprep.subr.mxu0 0.0
    %351 = vmatpush1.msra.mxu0 %v321
    %352 = vmatprep.subr.mxu0 0.0
    %353 = vmatpush1.msra.mxu0 %v320
    %354 = vmatprep.subr.mxu0 0.0
    %355 = vmatpush1.msra.mxu0 %v319
    %356 = vmatprep.subr.mxu0 0.0
    %357 = vmatpush1.msra.mxu0 %v318
    %358 = vmatprep.subr.mxu0 0.0
    %359 = vmatpush1.msra.mxu0 %v317
    %360 = vmatprep.subr.mxu0 0.0
    %361 = vmatpush1.msra.mxu0 %v316
    %362 = vmatprep.subr.mxu0 0.0
    %363 = vmatpush2.msra.mxu0 0.0
    %364 = vmatprep.subr.mxu0 0.0
    %365 = vmatpush2.msra.mxu0 0.0
    %366 = vmatprep.subr.mxu0 0.0
    %367 = vmatpush2.msra.mxu0 0.0
    %368 = vmatprep.subr.mxu0 0.0
    %369 = vmatpush2.msra.mxu0 0.0
    %370 = vmatprep.subr.mxu0 0.0
    %371 = vmatpush2.msra.mxu0 0.0
    %372 = vmatprep.subr.mxu0 0.0
    %373 = vmatpush2.msra.mxu0 0.0
    %374 = vmatprep.subr.mxu0 0.0
    %375 = vmatpush2.msra.mxu0 0.0
    %376 = vmatprep.subr.mxu0 0.0
    %377 = vmatpush2.msra.mxu0 0.0
    %378 = vmatprep.subr.mxu0 0.0
    %379 = vmatpush2.msra.mxu0 0.0
    %380 = vmatprep.subr.mxu0 0.0
    %381 = vmatpush2.msra.mxu0 0.0
    %382 = vmatprep.subr.mxu0 0.0
    %383 = vmatpush2.msra.mxu0 0.0
    %384 = vmatprep.subr.mxu0 0.0
    %385 = vmatpush2.msra.mxu0 0.0
    %386 = vmatprep.subr.mxu0 0.0
    %387 = vmatpush2.msra.mxu0 0.0
    %388 = vmatprep.subr.mxu0 0.0
    %389 = vmatpush2.msra.mxu0 0.0
    %390 = vmatprep.subr.mxu0 0.0
    %391 = vmatpush2.msra.mxu0 0.0
    %392 = vmatprep.subr.mxu0 0.0
    %393 = vmatpush2.msra.mxu0 0.0
    %394 = vmatprep.mubr.f32.mxu0 0.0
    %395 = vmatmul.mubr.f32.gmra.mxu0 %v328
    %v396 = vpop.f32.mrf.mxu0
    %v397 = vadd.f32 0.0, %v396
    %v398 = vpop.f32.mrf.mxu0
    %399 = vdwg.mxu0
    %v402 = vrot.slane %v204, 7
    %v403 = vsel %vm227, %v402, %v203
    %v404 = vsel %vm229, %v403, 0
    %406 = vmatprep.subr.mxu0 0.0
    %407 = vmatpush1.msra.mxu0 0.0
    %408 = vmatprep.subr.mxu0 0.0
    %409 = vmatpush1.msra.mxu0 0.0
    %410 = vmatprep.subr.mxu0 0.0
    %411 = vmatpush1.msra.mxu0 0.0
    %412 = vmatprep.subr.mxu0 0.0
    %413 = vmatpush1.msra.mxu0 0.0
    %414 = vmatprep.subr.mxu0 0.0
    %415 = vmatpush1.msra.mxu0 0.0
    %416 = vmatprep.subr.mxu0 0.0
    %417 = vmatpush1.msra.mxu0 0.0
    %418 = vmatprep.subr.mxu0 0.0
    %419 = vmatpush1.msra.mxu0 0.0
    %420 = vmatprep.subr.mxu0 0.0
    %421 = vmatpush1.msra.mxu0 0.0
    %422 = vmatprep.subr.mxu0 0.0
    %423 = vmatpush1.msra.mxu0 %v212
    %424 = vmatprep.subr.mxu0 0.0
    %425 = vmatpush1.msra.mxu0 %v211
    %426 = vmatprep.subr.mxu0 0.0
    %427 = vmatpush1.msra.mxu0 %v210
    %428 = vmatprep.subr.mxu0 0.0
    %429 = vmatpush1.msra.mxu0 %v209
    %430 = vmatprep.subr.mxu0 0.0
    %431 = vmatpush1.msra.mxu0 %v208
    %432 = vmatprep.subr.mxu0 0.0
    %433 = vmatpush1.msra.mxu0 %v207
    %434 = vmatprep.subr.mxu0 0.0
    %435 = vmatpush1.msra.mxu0 %v206
    %436 = vmatprep.subr.mxu0 0.0
    %437 = vmatpush1.msra.mxu0 %v205
    %438 = vmatprep.subr.mxu0 0.0
    %439 = vmatpush2.msra.mxu0 0.0
    %440 = vmatprep.subr.mxu0 0.0
    %441 = vmatpush2.msra.mxu0 0.0
    %442 = vmatprep.subr.mxu0 0.0
    %443 = vmatpush2.msra.mxu0 0.0
    %444 = vmatprep.subr.mxu0 0.0
    %445 = vmatpush2.msra.mxu0 0.0
    %446 = vmatprep.subr.mxu0 0.0
    %447 = vmatpush2.msra.mxu0 0.0
    %448 = vmatprep.subr.mxu0 0.0
    %449 = vmatpush2.msra.mxu0 0.0
    %450 = vmatprep.subr.mxu0 0.0
    %451 = vmatpush2.msra.mxu0 0.0
    %452 = vmatprep.subr.mxu0 0.0
    %453 = vmatpush2.msra.mxu0 0.0
    %454 = vmatprep.subr.mxu0 0.0
    %455 = vmatpush2.msra.mxu0 0.0
    %456 = vmatprep.subr.mxu0 0.0
    %457 = vmatpush2.msra.mxu0 0.0
    %458 = vmatprep.subr.mxu0 0.0
    %459 = vmatpush2.msra.mxu0 0.0
    %460 = vmatprep.subr.mxu0 0.0
    %461 = vmatpush2.msra.mxu0 0.0
    %462 = vmatprep.subr.mxu0 0.0
    %463 = vmatpush2.msra.mxu0 0.0
    %464 = vmatprep.subr.mxu0 0.0
    %465 = vmatpush2.msra.mxu0 0.0
    %466 = vmatprep.subr.mxu0 0.0
    %467 = vmatpush2.msra.mxu0 0.0
    %468 = vmatprep.subr.mxu0 0.0
    %469 = vmatpush2.msra.mxu0 0.0
    %470 = vmatprep.mubr.f32.mxu0 0.0
    %471 = vmatmul.mubr.f32.gmra.mxu0 %v404
    %v472 = vpop.f32.mrf.mxu0
    %v473 = vadd.f32 %v299, %v472
    %v474 = vpop.f32.mrf.mxu0
    %475 = vdwg.mxu0
    %v478 = vrot.slane %v303, 7
    %v479 = vsel %vm227, %v478, %v302
    %v480 = vsel %vm229, %v479, 0
    %482 = vmatprep.subr.mxu0 0.0
    %483 = vmatpush1.msra.mxu0 0.0
    %484 = vmatprep.subr.mxu0 0.0
    %485 = vmatpush1.msra.mxu0 0.0
    %486 = vmatprep.subr.mxu0 0.0
    %487 = vmatpush1.msra.mxu0 0.0
    %488 = vmatprep.subr.mxu0 0.0
    %489 = vmatpush1.msra.mxu0 0.0
    %490 = vmatprep.subr.mxu0 0.0
    %491 = vmatpush1.msra.mxu0 0.0
    %492 = vmatprep.subr.mxu0 0.0
    %493 = vmatpush1.msra.mxu0 0.0
    %494 = vmatprep.subr.mxu0 0.0
    %495 = vmatpush1.msra.mxu0 0.0
    %496 = vmatprep.subr.mxu0 0.0
    %497 = vmatpush1.msra.mxu0 0.0
    %498 = vmatprep.subr.mxu0 0.0
    %499 = vmatpush1.msra.mxu0 %v312
    %500 = vmatprep.subr.mxu0 0.0
    %501 = vmatpush1.msra.mxu0 %v311
    %502 = vmatprep.subr.mxu0 0.0
    %503 = vmatpush1.msra.mxu0 %v310
    %504 = vmatprep.subr.mxu0 0.0
    %505 = vmatpush1.msra.mxu0 %v309
    %506 = vmatprep.subr.mxu0 0.0
    %507 = vmatpush1.msra.mxu0 %v308
    %508 = vmatprep.subr.mxu0 0.0
    %509 = vmatpush1.msra.mxu0 %v307
    %510 = vmatprep.subr.mxu0 0.0
    %511 = vmatpush1.msra.mxu0 %v306
    %512 = vmatprep.subr.mxu0 0.0
    %513 = vmatpush1.msra.mxu0 %v305
    %514 = vmatprep.subr.mxu0 0.0
    %515 = vmatpush2.msra.mxu0 0.0
    %516 = vmatprep.subr.mxu0 0.0
    %517 = vmatpush2.msra.mxu0 0.0
    %518 = vmatprep.subr.mxu0 0.0
    %519 = vmatpush2.msra.mxu0 0.0
    %520 = vmatprep.subr.mxu0 0.0
    %521 = vmatpush2.msra.mxu0 0.0
    %522 = vmatprep.subr.mxu0 0.0
    %523 = vmatpush2.msra.mxu0 0.0
    %524 = vmatprep.subr.mxu0 0.0
    %525 = vmatpush2.msra.mxu0 0.0
    %526 = vmatprep.subr.mxu0 0.0
    %527 = vmatpush2.msra.mxu0 0.0
    %528 = vmatprep.subr.mxu0 0.0
    %529 = vmatpush2.msra.mxu0 0.0
    %530 = vmatprep.subr.mxu0 0.0
    %531 = vmatpush2.msra.mxu0 0.0
    %532 = vmatprep.subr.mxu0 0.0
    %533 = vmatpush2.msra.mxu0 0.0
    %534 = vmatprep.subr.mxu0 0.0
    %535 = vmatpush2.msra.mxu0 0.0
    %536 = vmatprep.subr.mxu0 0.0
    %537 = vmatpush2.msra.mxu0 0.0
    %538 = vmatprep.subr.mxu0 0.0
    %539 = vmatpush2.msra.mxu0 0.0
    %540 = vmatprep.subr.mxu0 0.0
    %541 = vmatpush2.msra.mxu0 0.0
    %542 = vmatprep.subr.mxu0 0.0
    %543 = vmatpush2.msra.mxu0 0.0
    %544 = vmatprep.subr.mxu0 0.0
    %545 = vmatpush2.msra.mxu0 0.0
    %546 = vmatprep.mubr.f32.mxu0 0.0
    %547 = vmatmul.mubr.f32.gmra.mxu0 %v480
    %v548 = vpop.f32.mrf.mxu0
    %v549 = vadd.f32 %v397, %v548
    %v550 = vpop.f32.mrf.mxu0
    %551 = vdwg.mxu0
    %v552 = vadd.f32 %v473, %v549
    %v553 = vld [vmem:[%s4] sm:$0x1]
    %v555 = vlaneseq
    %v556 = vshrl.u32 %v555, 7
    %v557 = vsub.s32 0, %v556
    %v558 = vrot.slane %v553, %v557
    %v560 = vadd.f32 %v552, %v558
    %v561 = vmul.f32 %v560, %v560
    %v562 = vld [vmem:[%s5] sm:$0xff]
    %v563 = vld [vmem:[%s5 + $0x8] sm:$0xff]
    %v564 = vld [vmem:[%s5 + $0x10] sm:$0xff]
    %v565 = vld [vmem:[%s5 + $0x18] sm:$0xff]
    %v566 = vld [vmem:[%s5 + $0x20] sm:$0xff]
    %v567 = vld [vmem:[%s5 + $0x28] sm:$0xff]
    %v568 = vld [vmem:[%s5 + $0x30] sm:$0xff]
    %v569 = vld [vmem:[%s5 + $0x38] sm:$0xff]
    %v570 = vld [vmem:[%s6] sm:$0x1]
    %v572 = vlaneseq
    %v573 = vshrl.u32 %v572, 7
    %v574 = vsub.s32 0, %v573
    %v575 = vrot.slane %v570, %v574
    %v578 = vsel %vm229, %v561, 0
    %580 = vmatprep.subr.mxu0 0.0
    %581 = vmatpush1.msra.mxu0 0.0
    %582 = vmatprep.subr.mxu0 0.0
    %583 = vmatpush1.msra.mxu0 0.0
    %584 = vmatprep.subr.mxu0 0.0
    %585 = vmatpush1.msra.mxu0 0.0
    %586 = vmatprep.subr.mxu0 0.0
    %587 = vmatpush1.msra.mxu0 0.0
    %588 = vmatprep.subr.mxu0 0.0
    %589 = vmatpush1.msra.mxu0 0.0
    %590 = vmatprep.subr.mxu0 0.0
    %591 = vmatpush1.msra.mxu0 0.0
    %592 = vmatprep.subr.mxu0 0.0
    %593 = vmatpush1.msra.mxu0 0.0
    %594 = vmatprep.subr.mxu0 0.0
    %595 = vmatpush1.msra.mxu0 0.0
    %596 = vmatprep.subr.mxu0 0.0
    %597 = vmatpush1.msra.mxu0 %v569
    %598 = vmatprep.subr.mxu0 0.0
    %599 = vmatpush1.msra.mxu0 %v568
    %600 = vmatprep.subr.mxu0 0.0
    %601 = vmatpush1.msra.mxu0 %v567
    %602 = vmatprep.subr.mxu0 0.0
    %603 = vmatpush1.msra.mxu0 %v566
    %604 = vmatprep.subr.mxu0 0.0
    %605 = vmatpush1.msra.mxu0 %v565
    %606 = vmatprep.subr.mxu0 0.0
    %607 = vmatpush1.msra.mxu0 %v564
    %608 = vmatprep.subr.mxu0 0.0
    %609 = vmatpush1.msra.mxu0 %v563
    %610 = vmatprep.subr.mxu0 0.0
    %611 = vmatpush1.msra.mxu0 %v562
    %612 = vmatprep.subr.mxu0 0.0
    %613 = vmatpush2.msra.mxu0 0.0
    %614 = vmatprep.subr.mxu0 0.0
    %615 = vmatpush2.msra.mxu0 0.0
    %616 = vmatprep.subr.mxu0 0.0
    %617 = vmatpush2.msra.mxu0 0.0
    %618 = vmatprep.subr.mxu0 0.0
    %619 = vmatpush2.msra.mxu0 0.0
    %620 = vmatprep.subr.mxu0 0.0
    %621 = vmatpush2.msra.mxu0 0.0
    %622 = vmatprep.subr.mxu0 0.0
    %623 = vmatpush2.msra.mxu0 0.0
    %624 = vmatprep.subr.mxu0 0.0
    %625 = vmatpush2.msra.mxu0 0.0
    %626 = vmatprep.subr.mxu0 0.0
    %627 = vmatpush2.msra.mxu0 0.0
    %628 = vmatprep.subr.mxu0 0.0
    %629 = vmatpush2.msra.mxu0 0.0
    %630 = vmatprep.subr.mxu0 0.0
    %631 = vmatpush2.msra.mxu0 0.0
    %632 = vmatprep.subr.mxu0 0.0
    %633 = vmatpush2.msra.mxu0 0.0
    %634 = vmatprep.subr.mxu0 0.0
    %635 = vmatpush2.msra.mxu0 0.0
    %636 = vmatprep.subr.mxu0 0.0
    %637 = vmatpush2.msra.mxu0 0.0
    %638 = vmatprep.subr.mxu0 0.0
    %639 = vmatpush2.msra.mxu0 0.0
    %640 = vmatprep.subr.mxu0 0.0
    %641 = vmatpush2.msra.mxu0 0.0
    %642 = vmatprep.subr.mxu0 0.0
    %643 = vmatpush2.msra.mxu0 0.0
    %644 = vmatprep.mubr.f32.mxu0 0.0
    %645 = vmatmul.mubr.f32.gmra.mxu0 %v578
    %v646 = vpop.f32.mrf.mxu0
    %v647 = vadd.f32 %v575, %v646
    %v648 = vpop.f32.mrf.mxu0
    %649 = vdwg.mxu0
    %650 = vst [vmem:[#allocation3] sm:$0x3] %v647
    // Predicated region
    $region30: #{convnet_forward.1} parent=1 // pred_check
      _
    $region31: #{convnet_forward.1} parent=1 // pred_check_branch
      %652 = sbr.rel (0) target = $region33
    $region32: #{convnet_forward.1} parent=1 // pred_region
      %s654 = ssub.s32 32, 32
      %655 = vsyncadd [#allocation4], %s654
      %s657 = sshll.u32 [#allocation3], 4
      %s658 = int_to_ptr.vmem [resolvable:$true] %s657
      %660 = dma.vmem_to_hbm [thread:$0]  %s658, 32, %s7, [#allocation4]
    $region33: #{convnet_forward.1} parent=1 // pred_fallthru
      _
    // Predicated region
    $region34: #{convnet_forward.1} parent=1 // pred_check
      _
    $region35: #{convnet_forward.1} parent=1 // pred_check_branch
      %662 = sbr.rel (0) target = $region37
    $region36: #{convnet_forward.1} parent=1 // pred_region
      %663 = dma.done [#allocation4], 32
    $region37: #{convnet_forward.1} parent=1 // pred_fallthru
      _
    %664 = vsyncpa [#allocation4], 1

</llo_original>
